<compile_context>
chip_gen: v7x
topology: tpu7x:2x2x1
jax: 0.10.0
libtpu: 0.0.40
codegen_flags: <defaults>
</compile_context>

<pallas_src>
import functools

import jax
import jax.numpy as jnp
from jax.experimental import pallas as pl
from jax.experimental.pallas import tpu as pltpu

_XY_BUDGET = 32 << 20            # total bytes for the double-buffered x/y tiles
_SUBLANE = {4: 8, 2: 16, 1: 32}  # dtype-dependent sublane packing unit


# --------------------------------------------------------------------------
# Kernels
# --------------------------------------------------------------------------

def _accumulate_sum(sum_ref, xf, s, hw, ragged):
    """Add this tile's per-channel partial sums into the resident output block.

    Steady state is pure VALU (add vreg groups lane-wise into (tc, 128)); the
    cross-lane reduce happens once, outside the kernel.  The tail tile of a
    ragged HW is masked with a lane iota so padding never enters the sum."""
    if ragged:
        tm = xf.shape[-1]
        rem = hw - s * tm                      # >= 1 by construction of the grid
        lane = jax.lax.broadcasted_iota(jnp.int32, xf.shape, 1)
        xf = jnp.where(lane < rem, xf, 0.0)
    if sum_ref.shape[-1] == 128 and xf.shape[-1] % 128 == 0:
        sum_ref[...] += xf.reshape(xf.shape[0], -1, 128).sum(axis=1)
    else:                                       # tiny / sub-128 spatial dims
        sum_ref[...] += jnp.sum(xf, axis=1, keepdims=True)


def _fused_norm_sum_kernel(x_ref, shift_ref, y_ref, sum_ref, *, hw, ragged):
    """Single streaming pass (training, bn_lag == 0):
       y = x + shift   (shift = bias - running_mean, per channel)
       while accumulating per-channel partial sums into the resident sum block."""
    n = pl.program_id(1)
    s = pl.program_id(2)

    @pl.when((n == 0) & (s == 0))
    def _():
        sum_ref[...] = jnp.zeros_like(sum_ref)

    xf = x_ref[...].astype(jnp.float32)                     # (tc, tm)
    y_ref[...] = (xf + shift_ref[...]).astype(y_ref.dtype)
    _accumulate_sum(sum_ref, xf, s, hw, ragged)


def _sum_kernel(x_ref, sum_ref, *, hw, ragged):
    """Per-channel partial sums over batch and spatial (bn_lag > 0 first pass)."""
    n = pl.program_id(1)
    s = pl.program_id(2)

    @pl.when((n == 0) & (s == 0))
    def _():
        sum_ref[...] = jnp.zeros_like(sum_ref)

    _accumulate_sum(sum_ref, x_ref[...].astype(jnp.float32), s, hw, ragged)


def _norm_kernel(x_ref, shift_ref, y_ref):
    """y = x + shift (per-channel broadcast).  Eval path / bn_lag>0 second pass."""
    y_ref[...] = (x_ref[...].astype(jnp.float32) + shift_ref[...]).astype(y_ref.dtype)


# --------------------------------------------------------------------------
# Tiling helpers
# --------------------------------------------------------------------------

def _pick_channel_tile(C, itemsize):
    """Channel (sublane) tile: dtype-aware packing unit, divides C, and when
    possible >= 2 tiles so the 'parallel' channel axis can megacore-shard."""
    sub = _SUBLANE.get(itemsize, 8)
    if C % sub != 0:
        return C                      # full-dim channel block: always legal
    tc = min(C, 256)
    tc -= tc % sub
    while C % tc != 0:
        tc -= sub
    if C // tc < 2 and tc >= 2 * sub:  # give megacore a second channel tile
        half = tc // 2
        half -= half % sub
        while half >= sub and C % half != 0:
            half -= sub
        if half >= sub:
            tc = half
    return tc


def _pick_spatial_tile(HW, tc, itemsize, per_buf_bytes):
    """Lane tile: multiple of 128 (lane-dense, unmasked stores), sized from the
    per-buffer VMEM budget.  Only HW < 128 falls back to the full (ragged) dim."""
    if HW < 128:
        return HW                     # full-dim block (legal); single tiny tile
    cap_elems = max(per_buf_bytes // (tc * itemsize), 128)
    tm = min((HW // 128) * 128, (cap_elems // 128) * 128)
    return max(tm, 128)


def _vmem_limit(nbytes):
    """Raise the scoped-VMEM limit to cover the footprint; cap under v7x's 64 MiB."""
    return int(min(max(nbytes + (4 << 20), 32 << 20), 48 << 20))


# --------------------------------------------------------------------------
# pallas_call wrappers
# --------------------------------------------------------------------------

def _run_fused(x3, shift, tc, tm):
    N, C, HW = x3.shape
    isize = x3.dtype.itemsize
    lanes = 128 if tm % 128 == 0 else 1
    ragged = (HW % tm) != 0
    grid = (pl.cdiv(C, tc), N, pl.cdiv(HW, tm))
    footprint = 4 * tc * tm * isize + 2 * tc * 4 + 2 * tc * lanes * 4
    kernel = functools.partial(_fused_norm_sum_kernel, hw=HW, ragged=ragged)
    return pl.pallas_call(
        kernel,
        out_shape=(jax.ShapeDtypeStruct((N, C, HW), x3.dtype),
                   jax.ShapeDtypeStruct((C, lanes), jnp.float32)),
        grid_spec=pltpu.PrefetchScalarGridSpec(
            num_scalar_prefetch=0,
            grid=grid,
            in_specs=[pl.BlockSpec((None, tc, tm), lambda c, n, s: (n, c, s)),
                      pl.BlockSpec((tc, 1), lambda c, n, s: (c, 0))],
            out_specs=(pl.BlockSpec((None, tc, tm), lambda c, n, s: (n, c, s)),
                       pl.BlockSpec((tc, lanes), lambda c, n, s: (c, 0)))),
        compiler_params=pltpu.CompilerParams(
            dimension_semantics=("parallel", "arbitrary", "arbitrary"),
            vmem_limit_bytes=_vmem_limit(footprint)),
    )(x3, shift)


def _run_sum(x3, tc, tm):
    N, C, HW = x3.shape
    isize = x3.dtype.itemsize
    lanes = 128 if tm % 128 == 0 else 1
    ragged = (HW % tm) != 0
    grid = (pl.cdiv(C, tc), N, pl.cdiv(HW, tm))
    footprint = 2 * tc * tm * isize + 2 * tc * lanes * 4
    kernel = functools.partial(_sum_kernel, hw=HW, ragged=ragged)
    return pl.pallas_call(
        kernel,
        out_shape=jax.ShapeDtypeStruct((C, lanes), jnp.float32),
        grid_spec=pltpu.PrefetchScalarGridSpec(
            num_scalar_prefetch=0,
            grid=grid,
            in_specs=[pl.BlockSpec((None, tc, tm), lambda c, n, s: (n, c, s))],
            out_specs=pl.BlockSpec((tc, lanes), lambda c, n, s: (c, 0))),
        compiler_params=pltpu.CompilerParams(
            dimension_semantics=("parallel", "arbitrary", "arbitrary"),
            vmem_limit_bytes=_vmem_limit(footprint)),
    )(x3)


def _run_norm(x3, shift, tc, tm):
    N, C, HW = x3.shape
    isize = x3.dtype.itemsize
    grid = (pl.cdiv(C, tc), N, pl.cdiv(HW, tm))
    footprint = 4 * tc * tm * isize + 2 * tc * 4
    return pl.pallas_call(
        _norm_kernel,
        out_shape=jax.ShapeDtypeStruct((N, C, HW), x3.dtype),
        grid_spec=pltpu.PrefetchScalarGridSpec(
            num_scalar_prefetch=0,
            grid=grid,
            in_specs=[pl.BlockSpec((None, tc, tm), lambda c, n, s: (n, c, s)),
                      pl.BlockSpec((tc, 1), lambda c, n, s: (c, 0))],
            out_specs=pl.BlockSpec((None, tc, tm), lambda c, n, s: (n, c, s))),
        compiler_params=pltpu.CompilerParams(
            dimension_semantics=("parallel", "parallel", "parallel"),
            vmem_limit_bytes=_vmem_limit(footprint)),
    )(x3, shift)


# --------------------------------------------------------------------------
# Forward (functional equivalent of MovingBatchNormNd.forward for NCHW input)
# --------------------------------------------------------------------------

def moving_batch_norm_2d(x, running_mean, bias, step, *,
                         decay=0.1, bn_lag=0.0, affine=True, training=True):
    """x: (N, C, H, W) in its native dtype.  Returns (y, new_running_mean, new_step)."""
    N, C, H, W = x.shape
    HW = H * W
    M = N * HW

    x3 = x.reshape(N, C, HW)                          # free reshape of NCHW
    rm = running_mean.astype(jnp.float32)
    b = bias.astype(jnp.float32) if affine else jnp.zeros((C,), jnp.float32)

    isize = jnp.dtype(x.dtype).itemsize
    tc = _pick_channel_tile(C, isize)
    tm_rw = _pick_spatial_tile(HW, tc, isize, _XY_BUDGET // 4)  # fused / norm (in+out)
    tm_r = _pick_spatial_tile(HW, tc, isize, _XY_BUDGET // 2)   # sum pass (in only)
    inv_m = jnp.float32(1.0 / M)

    if training and bn_lag == 0.0:
        # used_mean == running_mean (independent of batch mean) -> single fused pass.
        shift = (b - rm).reshape(C, 1)
        y3, sums = _run_fused(x3, shift, tc, tm_rw)
        bm = jnp.sum(sums, axis=1) * inv_m
        new_rm = rm - decay * (rm - bm)
        new_step = step + 1.0
    elif training:
        # bn_lag > 0: y depends on the batch mean -> reduction pass, then normalize.
        sums = _run_sum(x3, tc, tm_r)
        bm = jnp.sum(sums, axis=1) * inv_m
        um = bm - (1.0 - bn_lag) * (bm - rm)
        corr = 1.0 - jnp.power(jnp.float32(bn_lag),
                               jnp.asarray(step, jnp.float32) + 1.0)
        um = um / corr
        new_rm = rm - decay * (rm - bm)
        shift = (b - um).reshape(C, 1)
        y3 = _run_norm(x3, shift, tc, tm_rw)
        new_step = step + 1.0
    else:
        # eval: used_mean = running_mean, no buffer update.
        shift = (b - rm).reshape(C, 1)
        y3 = _run_norm(x3, shift, tc, tm_rw)
        new_rm = rm
        new_step = step

    return y3.reshape(N, C, H, W), new_rm, new_step


# --------------------------------------------------------------------------
# Pure-JAX reference (mirror of the PyTorch forward) and self-test
# --------------------------------------------------------------------------

def _reference(x, running_mean, bias, step, *, decay, bn_lag, affine, training):
    N, C, H, W = x.shape
    xf = x.astype(jnp.float32)
    x_t = jnp.transpose(xf, (1, 0, 2, 3)).reshape(C, -1)
    used_mean = running_mean
    new_rm = running_mean
    if training:
        bm = jnp.mean(x_t, axis=1)
        if bn_lag > 0:
            used_mean = bm - (1 - bn_lag) * (bm - running_mean)
            used_mean = used_mean / (1.0 - bn_lag ** (step + 1))
        new_rm = running_mean - decay * (running_mean - bm)
    y = xf - used_mean.reshape(1, C, 1, 1)
    if affine:
        y = y + bias.reshape(1, C, 1, 1)
    return y, new_rm


if __name__ == "__main__":
    key = jax.random.PRNGKey(0)

    ok = True
    # shapes: aligned, 128-multiple spatial, ragged spatial (HW=130), tiny ragged C/HW
    for (N, C, H, W) in [(2, 4, 16, 16), (2, 8, 16, 24), (2, 8, 10, 13), (2, 5, 6, 7)]:
        kx, kb, km = jax.random.split(jax.random.fold_in(key, N * C * H * W), 3)
        x = jax.random.normal(kx, (N, C, H, W), jnp.float32)
        bias = 0.1 * jax.random.normal(kb, (C,), jnp.float32)
        running_mean = 0.1 * jax.random.normal(km, (C,), jnp.float32)
        step = 0.0

        for bn_lag in (0.0, 0.2):          # default config and lagged config
            y, new_rm, new_step = moving_batch_norm_2d(
                x, running_mean, bias, step,
                decay=0.1, bn_lag=bn_lag, affine=True, training=True)
            y = jax.block_until_ready(y)
            new_rm = jax.block_until_ready(new_rm)

            y_ref, rm_ref = _reference(x, running_mean, bias, step,
                                       decay=0.1, bn_lag=bn_lag,
                                       affine=True, training=True)
            ok &= bool(jnp.allclose(y, y_ref, atol=1e-5, rtol=1e-5))
            ok &= bool(jnp.allclose(new_rm, rm_ref, atol=1e-5, rtol=1e-5))

        # eval-mode path
        y_eval, rm_eval, _ = moving_batch_norm_2d(
            x, running_mean, bias, step, training=False)
        y_eval = jax.block_until_ready(y_eval)
        ok &= bool(jnp.allclose(
            y_eval,
            x - running_mean.reshape(1, C, 1, 1) + bias.reshape(1, C, 1, 1),
            atol=1e-5, rtol=1e-5))

        # native-dtype path (bf16 in, bf16 out; f32 accumulation in-vreg)
        xb = x.astype(jnp.bfloat16)
        yb, rmb, _ = moving_batch_norm_2d(
            xb, running_mean, bias, step,
            decay=0.1, bn_lag=0.0, affine=True, training=True)
        yb = jax.block_until_ready(yb)
        yb_ref, rmb_ref = _reference(xb, running_mean, bias, step,
                                     decay=0.1, bn_lag=0.0,
                                     affine=True, training=True)
        ok &= bool(yb.dtype == jnp.bfloat16)
        ok &= bool(jnp.allclose(yb.astype(jnp.float32), yb_ref, atol=5e-2))
        ok &= bool(jnp.allclose(rmb, rmb_ref, atol=1e-3, rtol=1e-3))

    if ok:
        print("KERNEL_OK")
    else:
        raise SystemExit("mismatch vs reference")
</pallas_src>

<mosaic_0001>
module attributes {stable_mosaic.version = 11 : i64} {
  func.func @_fused_norm_sum_kernel(%arg0: i32, %arg1: i32, %arg2: i32, %arg3: memref<1x4x256xf32, #tpu.memory_space<vmem>>, %arg4: memref<4x1xf32, #tpu.memory_space<vmem>>, %arg5: memref<1x4x256xf32, #tpu.memory_space<vmem>>, %arg6: memref<4x128xf32, #tpu.memory_space<vmem>>) attributes {dimension_semantics = [#tpu.dimension_semantics<parallel>, #tpu.dimension_semantics<arbitrary>, #tpu.dimension_semantics<arbitrary>], iteration_bounds = array<i64: 1, 2, 1>, scalar_prefetch = 0 : i64, scratch_operands = 0 : i64, tpu.core_type = #tpu.core_type<tc>, window_params = [{transform_indices = @transform_0, window_bounds = array<i64: 1, 4, 256>}, {transform_indices = @transform_1, window_bounds = array<i64: 4, 1>}, {transform_indices = @transform_2, window_bounds = array<i64: 1, 4, 256>}, {transform_indices = @transform_3, window_bounds = array<i64: 4, 128>}]} {
    %c0_i32 = arith.constant 0 : i32
    %0 = arith.cmpi eq, %arg1, %c0_i32 : i32
    %c0_i32_0 = arith.constant 0 : i32
    %1 = arith.cmpi eq, %arg2, %c0_i32_0 : i32
    %2 = arith.andi %0, %1 : i1
    %3 = arith.extui %2 : i1 to i32
    %c0_i32_1 = arith.constant 0 : i32
    %4 = arith.cmpi ne, %3, %c0_i32_1 : i32
    scf.if %4 {
      %cst_13 = arith.constant 0.000000e+00 : f32
      %18 = vector.broadcast %cst_13 : f32 to vector<4x128xf32>
      %c0_14 = arith.constant 0 : index
      %c0_15 = arith.constant 0 : index
      %19 = vector.load %arg6[%c0_14, %c0_15] : memref<4x128xf32, #tpu.memory_space<vmem>>, vector<4x128xf32>
      tpu.vector_store %arg6[%c0_14, %c0_15], %18 {strides = array<i32>} : memref<4x128xf32, #tpu.memory_space<vmem>>, vector<4x128xf32>,
    } else {
    }
    %c0 = arith.constant 0 : index
    %c0_2 = arith.constant 0 : index
    %c0_3 = arith.constant 0 : index
    %5 = vector.load %arg3[%c0, %c0_2, %c0_3] : memref<1x4x256xf32, #tpu.memory_space<vmem>>, vector<1x4x256xf32>
    %6 = vector.shape_cast %5 : vector<1x4x256xf32> to vector<4x256xf32>
    %c0_4 = arith.constant 0 : index
    %c0_5 = arith.constant 0 : index
    %7 = vector.load %arg4[%c0_4, %c0_5] : memref<4x1xf32, #tpu.memory_space<vmem>>, vector<4x1xf32>
    %8 = vector.broadcast %7 : vector<4x1xf32> to vector<4x256xf32>
    %9 = arith.addf %6, %8 : vector<4x256xf32>
    %c0_6 = arith.constant 0 : index
    %c0_7 = arith.constant 0 : index
    %c0_8 = arith.constant 0 : index
    %10 = vector.load %arg5[%c0_6, %c0_7, %c0_8] : memref<1x4x256xf32, #tpu.memory_space<vmem>>, vector<1x4x256xf32>
    %11 = vector.shape_cast %10 : vector<1x4x256xf32> to vector<4x256xf32>
    %12 = vector.shape_cast %9 : vector<4x256xf32> to vector<1x4x256xf32>
    tpu.vector_store %arg5[%c0_6, %c0_7, %c0_8], %12 {strides = array<i32>} : memref<1x4x256xf32, #tpu.memory_space<vmem>>, vector<1x4x256xf32>,
    %c0_9 = arith.constant 0 : index
    %c0_10 = arith.constant 0 : index
    %13 = vector.load %arg6[%c0_9, %c0_10] : memref<4x128xf32, #tpu.memory_space<vmem>>, vector<4x128xf32>
    %14 = vector.shape_cast %6 : vector<4x256xf32> to vector<4x2x128xf32>
    %cst = arith.constant dense<0.000000e+00> : vector<4x128xf32>
    %15 = vector.multi_reduction <add>, %14, %cst [1] : vector<4x2x128xf32> to vector<4x128xf32>
    %16 = arith.addf %13, %15 : vector<4x128xf32>
    %c0_11 = arith.constant 0 : index
    %c0_12 = arith.constant 0 : index
    %17 = vector.load %arg6[%c0_11, %c0_12] : memref<4x128xf32, #tpu.memory_space<vmem>>, vector<4x128xf32>
    tpu.vector_store %arg6[%c0_11, %c0_12], %16 {strides = array<i32>} : memref<4x128xf32, #tpu.memory_space<vmem>>, vector<4x128xf32>,
    return
  }
  func.func @transform_0(%arg0: i32, %arg1: i32, %arg2: i32) -> (i32, i32, i32) {
    %c0_i32 = arith.constant 0 : i32
    return %arg1, %arg0, %arg2 : i32, i32, i32
  }
  func.func @transform_1(%arg0: i32, %arg1: i32, %arg2: i32) -> (i32, i32) {
    %c0_i32 = arith.constant 0 : i32
    %c0_i32_0 = arith.constant 0 : i32
    return %arg0, %c0_i32 : i32, i32
  }
  func.func @transform_2(%arg0: i32, %arg1: i32, %arg2: i32) -> (i32, i32, i32) {
    %c0_i32 = arith.constant 0 : i32
    return %arg1, %arg0, %arg2 : i32, i32, i32
  }
  func.func @transform_3(%arg0: i32, %arg1: i32, %arg2: i32) -> (i32, i32) {
    %c0_i32 = arith.constant 0 : i32
    %c0_i32_0 = arith.constant 0 : i32
    return %arg0, %c0_i32 : i32, i32
  }
}

</mosaic_0001>

<llo_original>
// kernel: tpu_custom_call.1
$region0: #{tpu_custom_call.1}
  #allocation0 [shape = 'u32[]', space=smem, size = 0x4, offset = 0x4, fixed_abs, tag = 'smem constant byte address 0x4 - core index']
  #allocation1 [shape = 'u32[144,128]{1,0:T(1,128)}', space=vmem, size = 0x12000, scoped, tag = 'internal scratch']
  %s0 = inlined_call_operand.hbm [shape: f32[2,4,256], index: 0, kind: input, shape index: {}]
  %s1 = inlined_call_operand.vmem [shape: f32[4,1], index: 1, kind: input, shape index: {}]
  %s2 = inlined_call_operand.hbm [shape: f32[2,4,256], index: 2, kind: output, shape index: {0}]
  %s3 = inlined_call_operand.hbm [shape: f32[4,128], index: 3, kind: output, shape index: {1}]
  %4 = xla_tuple %s2, %s3
  %s5 = sld [smem:[#allocation0]]
  $region57: #{tpu_custom_call.1} parent=0
    _
  %s7 = ssub.s32 1, %s5
  %s8 = scalar_select 0, %s7, %s5
  $region1: #{tpu_custom_call.1} parent=0
    #allocation2 [shape = 'u8[8192]{0}', space=vmem, size = 0x2000, scoped, tag = 'input window, operand 0']
    #allocation3 [shape = 's32[2]{0}', space=sflag, size = 0x8, scoped, tag = 'scoped memory for tpu_custom_call.1']
    #allocation4 [shape = 's32[2]{0}', space=sflag, size = 0x8, scoped, tag = 'scoped memory for tpu_custom_call.1']
    #allocation5 [shape = 'u8[8192]{0}', space=vmem, size = 0x2000, scoped, tag = 'output window, operand 0']
    #allocation6 [shape = 'u8[2048]{0}', space=vmem, size = 0x800, scoped, tag = 'output window, operand 1, single buffered']
    #allocation7 [shape = 's32[1]{0}', space=sflag, size = 0x4, scoped, tag = 'scoped memory for tpu_custom_call.1']
    %9 = vsyncpa [#allocation3], 0
    %s10 = scalar_lea.sflag [#allocation3], 1
    %11 = vsyncpa %s10, 0
    %12 = vsyncpa [#allocation4], 0
    %s13 = scalar_lea.sflag [#allocation4], 1
    %14 = vsyncpa %s13, 0
    %15 = vsyncpa [#allocation7], 0
    loop: start=0, step=1, limit=4
    $region2: #{tpu_custom_call.1} parent=1 // loop_pre_header
      _
    $region3: #{tpu_custom_call.1} parent=1 // loop_header
      %s17 = sphi 0, %s21
      %p18 = scmp.ge.s32.totalorder %s17, 4
      %s24 = sphi 0, %s43
      %s25 = sphi 0, %s39
      %s26 = sphi 0, %s35
      %s27 = sphi 0, %s24
      %s28 = sphi 0, %s25
      %s29 = sphi 0, %s26
      %s30 = sphi 0, %s27
      %s31 = sphi 0, %s28
      %s32 = sphi 0, %s29
      %s50 = sphi 0, %s52
      %s53 = sphi 0, %s50
      %s54 = sphi 0, %s53
      %s70 = sphi 0, %s54
      %s76 = sphi 0, %s78
      %s79 = sphi 0, %s76
      %s80 = sphi 0, %s79
      %s96 = sphi 0, %s80
      %s106 = sphi 0, %s108
      %s109 = sphi 0, %s106
      %s110 = sphi 0, %s109
      %s126 = sphi 0, %s110
      %s132 = sphi 0, %s134
      %s135 = sphi 0, %s132
      %s136 = sphi 0, %s135
      %s152 = sphi 0, %s136
    $region4: #{tpu_custom_call.1} parent=1 // loop_header_branch
      %20 = sbr.rel (%p18) target = $region8
    $region5: #{tpu_custom_call.1} parent=1 // loop_body
      %s22 = ssub.s32 %s17, 1
      %s23 = ssub.s32 %s17, 2
      %s33 = sadd.s32 1, %s26
      %p34 = scmp.ge.s32.totalorder %s33, 1
      %s35 = scalar_select %p34, 0, %s33
      %s36 = sadd.s32 1, %s25
      %s37 = scalar_select %p34, %s36, %s25
      %p38 = scmp.ge.s32.totalorder %s37, 2
      %s39 = scalar_select %p38, 0, %s37
      %s40 = sadd.s32 1, %s24
      %s41 = scalar_select %p38, %s40, %s24
      %p42 = scmp.ge.s32.totalorder %s41, 1
      %s43 = scalar_select %p42, 0, %s41
      %s44 = ssub.s32 %s25, %s39
      %s45 = ssub.s32 %s24, %s43
      %s46 = sor.u32 %s44, %s45
      %s47 = ssub.s32 %s26, %s35
      %s48 = sor.u32 %s46, %s47
      %p49 = scmp.eq.s32.totalorder %s48, 0
      %s51 = sadd.s32 %s50, 1
      %s52 = scalar_select %p49, %s50, %s51
      %p55 = pneg %p49
      %p56 = scmp.eq.s32.totalorder %s17, 1
      %p57 = por %p55, %p56
      %p58 = scmp.ne.s32.totalorder %s50, %s53
      %p59 = scmp.eq.s32.totalorder %s17, 0
      %p60 = por %p58, %p59
      %p61 = scmp.ne.s32.totalorder %s50, %s53
      %p62 = scmp.eq.s32.totalorder %s22, 1
      %p63 = por %p61, %p62
      %p64 = scmp.ne.s32.totalorder %s53, %s54
      %p65 = scmp.eq.s32.totalorder %s22, 0
      %p66 = por %p64, %p65
      %p67 = scmp.ne.s32.totalorder %s53, %s54
      %p68 = scmp.eq.s32.totalorder %s23, 1
      %p69 = por %p67, %p68
      %p71 = scmp.ne.s32.totalorder %s54, %s70
      %p72 = scmp.eq.s32.totalorder %s23, 0
      %p73 = por %p71, %p72
      %s74 = ssub.s32 %s24, %s43
      %p75 = scmp.eq.s32.totalorder %s74, 0
      %s77 = sadd.s32 %s76, 1
      %s78 = scalar_select %p75, %s76, %s77
      %p81 = pneg %p75
      %p82 = scmp.eq.s32.totalorder %s17, 1
      %p83 = por %p81, %p82
      %p84 = scmp.ne.s32.totalorder %s76, %s79
      %p85 = scmp.eq.s32.totalorder %s17, 0
      %p86 = por %p84, %p85
      %p87 = scmp.ne.s32.totalorder %s76, %s79
      %p88 = scmp.eq.s32.totalorder %s22, 1
      %p89 = por %p87, %p88
      %p90 = scmp.ne.s32.totalorder %s79, %s80
      %p91 = scmp.eq.s32.totalorder %s22, 0
      %p92 = por %p90, %p91
      %p93 = scmp.ne.s32.totalorder %s79, %s80
      %p94 = scmp.eq.s32.totalorder %s23, 1
      %p95 = por %p93, %p94
      %p97 = scmp.ne.s32.totalorder %s80, %s96
      %p98 = scmp.eq.s32.totalorder %s23, 0
      %p99 = por %p97, %p98
      %s100 = ssub.s32 %s25, %s39
      %s101 = ssub.s32 %s24, %s43
      %s102 = sor.u32 %s100, %s101
      %s103 = ssub.s32 %s26, %s35
      %s104 = sor.u32 %s102, %s103
      %p105 = scmp.eq.s32.totalorder %s104, 0
      %s107 = sadd.s32 %s106, 1
      %s108 = scalar_select %p105, %s106, %s107
      %p111 = pneg %p105
      %p112 = scmp.eq.s32.totalorder %s17, 1
      %p113 = por %p111, %p112
      %p114 = scmp.ne.s32.totalorder %s106, %s109
      %p115 = scmp.eq.s32.totalorder %s17, 0
      %p116 = por %p114, %p115
      %p117 = scmp.ne.s32.totalorder %s106, %s109
      %p118 = scmp.eq.s32.totalorder %s22, 1
      %p119 = por %p117, %p118
      %p120 = scmp.ne.s32.totalorder %s109, %s110
      %p121 = scmp.eq.s32.totalorder %s22, 0
      %p122 = por %p120, %p121
      %p123 = scmp.ne.s32.totalorder %s109, %s110
      %p124 = scmp.eq.s32.totalorder %s23, 1
      %p125 = por %p123, %p124
      %p127 = scmp.ne.s32.totalorder %s110, %s126
      %p128 = scmp.eq.s32.totalorder %s23, 0
      %p129 = por %p127, %p128
      %s130 = ssub.s32 %s24, %s43
      %p131 = scmp.eq.s32.totalorder %s130, 0
      %s133 = sadd.s32 %s132, 1
      %s134 = scalar_select %p131, %s132, %s133
      %p137 = pneg %p131
      %p138 = scmp.eq.s32.totalorder %s17, 1
      %p139 = por %p137, %p138
      %p140 = scmp.ne.s32.totalorder %s132, %s135
      %p141 = scmp.eq.s32.totalorder %s17, 0
      %p142 = por %p140, %p141
      %p143 = scmp.ne.s32.totalorder %s132, %s135
      %p144 = scmp.eq.s32.totalorder %s22, 1
      %p145 = por %p143, %p144
      %p146 = scmp.ne.s32.totalorder %s135, %s136
      %p147 = scmp.eq.s32.totalorder %s22, 0
      %p148 = por %p146, %p147
      %p149 = scmp.ne.s32.totalorder %s135, %s136
      %p150 = scmp.eq.s32.totalorder %s23, 1
      %p151 = por %p149, %p150
      %p153 = scmp.ne.s32.totalorder %s136, %s152
      %p154 = scmp.eq.s32.totalorder %s23, 0
      %p155 = por %p153, %p154
      %p156 = scmp.le.s32.totalorder 1, %s17
      %p157 = scmp.lt.s32.totalorder %s17, 3
      %p158 = pnand %p156, %p157
      %p159 = pneg %p158
      // Predicated region
      $region9: #{tpu_custom_call.1} parent=5 // pred_check
        _
      $region10: #{tpu_custom_call.1} parent=5 // pred_check_branch
        %161 = sbr.rel (%p158) target = $region12
      $region11: #{tpu_custom_call.1} parent=5 // pred_region
        %s162 = ssub.s32 %s17, 1
        // Predicated region
        $region13: #{tpu_custom_call.1} parent=11 // pred_check
          %p163 = pneg %p92
        $region14: #{tpu_custom_call.1} parent=11 // pred_check_branch
          %165 = sbr.rel (%p163) target = $region16
        $region15: #{tpu_custom_call.1} parent=11 // pred_region
          %p166 = scmp.lt.s32.totalorder %s27, 0
          %s167 = scalar_select %p166, %s27, 0
          %s168 = smul.addr %s167, 4
          %s169 = scalar_lea.vmem %s1, %s168
        $region16: #{tpu_custom_call.1} parent=11 // pred_fallthru
          _
      $region12: #{tpu_custom_call.1} parent=5 // pred_fallthru
        _
      %p170 = scmp.lt.s32.totalorder %s17, 2
      // Predicated region
      $region17: #{tpu_custom_call.1} parent=5 // pred_check
        %p171 = pneg %p170
      $region18: #{tpu_custom_call.1} parent=5 // pred_check_branch
        %173 = sbr.rel (%p171) target = $region20
      $region19: #{tpu_custom_call.1} parent=5 // pred_region
        // Predicated region
        $region21: #{tpu_custom_call.1} parent=19 // pred_check
          %p174 = pneg %p60
        $region22: #{tpu_custom_call.1} parent=19 // pred_check_branch
          %176 = sbr.rel (%p174) target = $region24
        $region23: #{tpu_custom_call.1} parent=19 // pred_region
          %s177 = sand.u32 %s50, 1
          %s178 = scalar_lea.sflag [#allocation3], %s177
          %s179 = sand.u32 %s50, 1
          %s180 = smul.addr %s179, 8
          %s181 = scalar_lea.vmem [#allocation2], %s180
          %s182 = smul.u32 2, %s26
          %s184 = ssub.s32 128, 128
          %185 = vsyncadd %s178, %s184
          %s186 = smul.addr %s24, 2
          %s187 = sadd.s32 %s182, %s186
          %s188 = smul.addr %s25, 2
          %s189 = sadd.s32 %s187, %s188
          %s190 = smul.addr %s189, 64
          %s191 = scalar_lea.hbm %s0, %s190
          %s193 = sshll.u32 %s181, 4
          %s194 = int_to_ptr.vmem [resolvable:$true] %s193
          %196 = dma.hbm_to_vmem [thread:$0]  %s191, 128, %s194, %s178
        $region24: #{tpu_custom_call.1} parent=19 // pred_fallthru
          _
      $region20: #{tpu_custom_call.1} parent=5 // pred_fallthru
        _
      %p197 = scmp.le.s32.totalorder 1, %s17
      %p198 = scmp.lt.s32.totalorder %s17, 3
      %p199 = pnand %p197, %p198
      %p200 = pneg %p199
      // Predicated region
      $region25: #{tpu_custom_call.1} parent=5 // pred_check
        _
      $region26: #{tpu_custom_call.1} parent=5 // pred_check_branch
        %202 = sbr.rel (%p199) target = $region28
      $region27: #{tpu_custom_call.1} parent=5 // pred_region
        %s203 = ssub.s32 %s17, 1
        %s204 = sand.u32 %s53, 1
        %s205 = scalar_lea.sflag [#allocation3], %s204
        %s206 = sand.u32 %s53, 1
        %s207 = smul.addr %s206, 8
        %s208 = scalar_lea.vmem [#allocation2], %s207
        // Predicated region
        $region29: #{tpu_custom_call.1} parent=27 // pred_check
          %p209 = pneg %p66
        $region30: #{tpu_custom_call.1} parent=27 // pred_check_branch
          %211 = sbr.rel (%p209) target = $region32
        $region31: #{tpu_custom_call.1} parent=27 // pred_region
          %212 = dma.done %s205, 128
        $region32: #{tpu_custom_call.1} parent=27 // pred_fallthru
          _
        %s213 = sand.u32 %s53, 1
        %s214 = scalar_lea.sflag [#allocation3], %s213
        %s215 = sand.u32 %s53, 1
        %s216 = smul.addr %s215, 8
        %s217 = scalar_lea.vmem [#allocation2], %s216
        %p218 = pneg %p66
        %p219 = pneg %p63
        %p220 = scmp.lt.s32.totalorder %s27, 0
        %s221 = scalar_select %p220, %s27, 0
        %s222 = smul.addr %s221, 4
        %s223 = scalar_lea.vmem %s1, %s222
        %p224 = pneg %p92
        %p225 = pneg %p89
        %p226 = pneg %p122
        %p227 = pneg %p119
        %s228 = sand.u32 %s109, 1
        %s229 = scalar_lea.sflag [#allocation4], %s228
        %s230 = sand.u32 %s109, 1
        %s231 = smul.addr %s230, 8
        %s232 = scalar_lea.vmem [#allocation5], %s231
        %p233 = pneg %p148
        %p234 = pneg %p145
        %s235 = smul.u32 2, %s29
        %p236 = scmp.lt.s32.totalorder %s27, 0
        %s237 = scalar_select %p236, %s27, 0
        %s238 = smul.addr %s237, 4
        %s239 = scalar_lea.vmem %s1, %s238
        %s240 = smul.u32 2, %s29
        %p241 = scmp.eq.s32.totalorder %s28, 0
        %p242 = scmp.eq.s32.totalorder %s29, 0
        %p243 = pnand %p241, %p242
        %p244 = pneg %p243
        // Predicated region
        $region33: #{tpu_custom_call.1} parent=27 // pred_check
          _
        $region34: #{tpu_custom_call.1} parent=27 // pred_check_branch
          %246 = sbr.rel (%p243) target = $region36
        $region35: #{tpu_custom_call.1} parent=27 // pred_region
          %247 = vst [vmem:[#allocation6] sm:$0xf] 0.0
        $region36: #{tpu_custom_call.1} parent=27 // pred_fallthru
          _
        %v248 = vld [vmem:[%s208] sm:$0xff]
        %v249 = vld [vmem:[%s239] sm:$0xf]
        %251 = vset.pattern.permute.xlu0 0
        %252 = vperm.xlu0 %251, %v249
        %v253 = vpop.permute.xlu0 %252
        %v255 = vunpack.c.l.s4 839922192
        %v256 = vunpack.c.0.s8 %v255
        %v257 = vlaneseq
        %v258 = vshrl.u32 %v257, 7
        %v259 = vsub.s32 %v256, %v258
        %v260 = vrot.slane %v253, %v259
        %v262 = vadd.f32 %v248, %v260
        %263 = vst [vmem:[%s232] sm:$0xff] %v262
        %v264 = vld [vmem:[#allocation6] sm:$0xf]
        %v266 = vrot.slane %v248, 4
        %v267 = vld [vmem:[%s208] sm:$0xff]
        %v269 = vunpack.c.l.s4 1983009808
        %v270 = vunpack.c.0.s8 %v269
        %v271 = vlaneseq
        %v272 = vshrl.u32 %v271, 7
        %v273 = vsub.s32 %v270, %v272
        %v274 = vrot.slane %v267, %v273
        %v277 = vunpack.c.l.s4 1983009808
        %v278 = vunpack.c.0.s8 %v277
        %v279 = vlaneseq
        %v280 = vshrl.u32 %v279, 7
        %v281 = vsub.s32 %v278, %v280
        %v282 = vrot.slane %v266, %v281
        %v283 = vcombine.low %v274, %v282
        %v284 = vcombine.high %v274, %v282
        %v286 = vunpack.c.l.s4 1934713408
        %v287 = vunpack.c.0.s8 %v286
        %v288 = vlaneseq
        %v289 = vshrl.u32 %v288, 7
        %v290 = vsub.s32 %v287, %v289
        %v291 = vrot.slane %v283, %v290
        %v293 = vunpack.c.l.s4 1934713408
        %v294 = vunpack.c.0.s8 %v293
        %v295 = vlaneseq
        %v296 = vshrl.u32 %v295, 7
        %v297 = vsub.s32 %v294, %v296
        %v298 = vrot.slane %v284, %v297
        %v299 = vcombine.high %v291, 0.0
        %v300 = vcombine.high %v298, 0.0
        %vm301 = vcmask 1041408
        %v302 = vsel %vm301, %v291, 0.0
        %v303 = vrot.slane %v302, 4
        %v304 = vadd.f32 %v302, %v303
        %v305 = vrot.slane %v304, 2
        %v306 = vadd.f32 %v304, %v305
        %v307 = vrot.slane %v306, 1
        %v308 = vadd.f32 %v306, %v307
        %v309 = vsel %vm301, %v299, 0.0
        %v310 = vrot.slane %v309, 4
        %v311 = vadd.f32 %v309, %v310
        %v312 = vrot.slane %v311, 2
        %v313 = vadd.f32 %v311, %v312
        %v314 = vrot.slane %v313, 1
        %v315 = vadd.f32 %v313, %v314
        %v316 = vsel %vm301, %v298, 0.0
        %v317 = vrot.slane %v316, 4
        %v318 = vadd.f32 %v316, %v317
        %v319 = vrot.slane %v318, 2
        %v320 = vadd.f32 %v318, %v319
        %v321 = vrot.slane %v320, 1
        %v322 = vadd.f32 %v320, %v321
        %v323 = vsel %vm301, %v300, 0.0
        %v324 = vrot.slane %v323, 4
        %v325 = vadd.f32 %v323, %v324
        %v326 = vrot.slane %v325, 2
        %v327 = vadd.f32 %v325, %v326
        %v328 = vrot.slane %v327, 1
        %v329 = vadd.f32 %v327, %v328
        %vm334 = vcmask 1041409
        %v335 = vsel %vm334, %v315, %v308
        %vm336 = vcmask 1042434
        %v337 = vsel %vm336, %v322, %v335
        %vm338 = vcmask 1043459
        %v339 = vsel %vm338, %v329, %v337
        %v341 = vadd.f32 %v264, %v339
        %342 = vst [vmem:[#allocation6] sm:$0xf] %v341
        %s343 = sand.u32 %s109, 1
        %s344 = scalar_lea.sflag [#allocation4], %s343
        %s345 = sand.u32 %s109, 1
        %s346 = smul.addr %s345, 8
        %s347 = scalar_lea.vmem [#allocation5], %s346
        // Predicated region
        $region37: #{tpu_custom_call.1} parent=27 // pred_check
          %p348 = pneg %p119
        $region38: #{tpu_custom_call.1} parent=27 // pred_check_branch
          %350 = sbr.rel (%p348) target = $region40
        $region39: #{tpu_custom_call.1} parent=27 // pred_region
          %s351 = smul.u32 2, %s29
          %s353 = ssub.s32 128, 128
          %354 = vsyncadd %s344, %s353
          %s355 = smul.addr %s27, 2
          %s356 = sadd.s32 %s351, %s355
          %s357 = smul.addr %s28, 2
          %s358 = sadd.s32 %s356, %s357
          %s359 = smul.addr %s358, 64
          %s360 = scalar_lea.hbm %s2, %s359
          %s362 = sshll.u32 %s347, 4
          %s363 = int_to_ptr.vmem [resolvable:$true] %s362
          %365 = dma.vmem_to_hbm [thread:$0]  %s363, 128, %s360, %s344
        $region40: #{tpu_custom_call.1} parent=27 // pred_fallthru
          _
        // Predicated region
        $region41: #{tpu_custom_call.1} parent=27 // pred_check
          %p366 = pneg %p145
        $region42: #{tpu_custom_call.1} parent=27 // pred_check_branch
          %368 = sbr.rel (%p366) target = $region44
        $region43: #{tpu_custom_call.1} parent=27 // pred_region
          %s370 = ssub.s32 64, 64
          %371 = vsyncadd [#allocation7], %s370
          %s372 = smul.addr %s27, 64
          %s373 = scalar_lea.hbm %s3, %s372
          %s375 = sshll.u32 [#allocation6], 4
          %s376 = int_to_ptr.vmem [resolvable:$true] %s375
          %378 = dma.vmem_to_hbm [thread:$0]  %s376, 64, %s373, [#allocation7]
        $region44: #{tpu_custom_call.1} parent=27 // pred_fallthru
          _
        // Predicated region
        $region45: #{tpu_custom_call.1} parent=27 // pred_check
          %p379 = pneg %p145
        $region46: #{tpu_custom_call.1} parent=27 // pred_check_branch
          %381 = sbr.rel (%p379) target = $region48
        $region47: #{tpu_custom_call.1} parent=27 // pred_region
          %382 = dma.done [#allocation7], 64
        $region48: #{tpu_custom_call.1} parent=27 // pred_fallthru
          _
      $region28: #{tpu_custom_call.1} parent=5 // pred_fallthru
        _
      %p383 = scmp.le.s32.totalorder 2, %s17
      // Predicated region
      $region49: #{tpu_custom_call.1} parent=5 // pred_check
        %p384 = pneg %p383
      $region50: #{tpu_custom_call.1} parent=5 // pred_check_branch
        %386 = sbr.rel (%p384) target = $region52
      $region51: #{tpu_custom_call.1} parent=5 // pred_region
        %s387 = ssub.s32 %s17, 2
        // Predicated region
        $region53: #{tpu_custom_call.1} parent=51 // pred_check
          %p388 = pneg %p125
        $region54: #{tpu_custom_call.1} parent=51 // pred_check_branch
          %390 = sbr.rel (%p388) target = $region56
        $region55: #{tpu_custom_call.1} parent=51 // pred_region
          %s391 = sand.u32 %s110, 1
          %s392 = scalar_lea.sflag [#allocation4], %s391
          %s393 = sand.u32 %s110, 1
          %s394 = smul.addr %s393, 8
          %s395 = scalar_lea.vmem [#allocation5], %s394
          %396 = dma.done %s392, 128
        $region56: #{tpu_custom_call.1} parent=51 // pred_fallthru
          _
      $region52: #{tpu_custom_call.1} parent=5 // pred_fallthru
        _
    $region6: #{tpu_custom_call.1} parent=1 // loop_footer
      %s21 = sadd.s32 1, %s17
    $region7: #{tpu_custom_call.1} parent=1 // loop_footer_branch
      %16 = sbr.rel target = $region3
    $region8: #{tpu_custom_call.1} parent=1 // loop_exit
      _
    %397 = vsyncpa [#allocation3], 1
    %s398 = scalar_lea.sflag [#allocation3], 1
    %399 = vsyncpa %s398, 1
    %400 = vsyncpa [#allocation4], 1
    %s401 = scalar_lea.sflag [#allocation4], 1
    %402 = vsyncpa %s401, 1
    %403 = vsyncpa [#allocation7], 1

</llo_original>
